<compile_context>
chip_gen: v7x
topology: tpu7x:2x2x1
jax: 0.10.0
libtpu: 0.0.40
codegen_flags: <defaults>
</compile_context>

<pallas_src>
import functools

import jax
import jax.numpy as jnp
from jax.experimental import pallas as pl
from jax.experimental.pallas import tpu as pltpu


def _round_up(x, m):
    return ((x + m - 1) // m) * m


def _pick_tile(total, candidates):
    for c in candidates:
        if total % c == 0:
            return c
    return total


def mlp_kernel(x_ref, w_ref, b_ref, o_ref, acc_ref):
    # x_ref:   (tm, tk)  activations tile
    # w_ref:   (tn, tk)  weight tile, PyTorch (H_out, H_in) layout
    # b_ref:   (1, tn)   bias tile (resident across K)
    # o_ref:   (tm, tn)  output tile
    # acc_ref: (tm, tn)  f32 accumulator, persists across the K grid axis
    k = pl.program_id(2)

    @pl.when(k == 0)
    def _():
        acc_ref[...] = jnp.zeros_like(acc_ref)

    # Contract last dim of x with last dim of W: (tm,tk) x (tn,tk) -> (tm,tn)
    acc_ref[...] += jax.lax.dot_general(
        x_ref[...], w_ref[...],
        dimension_numbers=(((1,), (1,)), ((), ())),
        preferred_element_type=jnp.float32,
    )

    @pl.when(k == pl.num_programs(2) - 1)
    def _():
        # Bias add + tanh only once, in the finalize branch.
        o_ref[...] = jnp.tanh(acc_ref[...] + b_ref[...]).astype(o_ref.dtype)


@jax.jit
def mlp_layer(features, weight, bias):
    """Pallas equivalent of nn.Linear(H, H) followed by nn.Tanh().

    features: (B, H) float32
    weight:   (H_out, H_in) float32  (PyTorch nn.Linear convention, NOT transposed)
    bias:     (H_out,) float32
    """
    B, H = features.shape
    Hout, Hin = weight.shape
    assert Hin == H and Hout == H, "MLPLayer uses a square hidden->hidden Linear"

    # --- TPU-friendly padded shapes (lane = 128 multiple, sublane = 8 multiple) ---
    Mp = _round_up(B, 8)          # batch rows
    Kp = _round_up(H, 128)        # contraction dim (H_in)
    Np = _round_up(H, 128)        # output dim (H_out)

    # Tile sizes: lane-dense, big enough to amortize per-step overhead but well
    # under the VMEM scoped limit even on v7x (64 MiB physical / 32 MiB default).
    tm = _pick_tile(Mp, (512, 256, 128, 64, 32, 16, 8))
    tn = _pick_tile(Np, (512, 256, 128))
    tk = _pick_tile(Kp, (512, 256, 128))

    # Pad only when needed (avoids extra HBM copies for already-aligned shapes).
    if (Mp, Kp) == (B, H):
        x_p = features
    else:
        x_p = jnp.zeros((Mp, Kp), features.dtype).at[:B, :H].set(features)
    if (Np, Kp) == (H, H):
        w_p = weight
    else:
        w_p = jnp.zeros((Np, Kp), weight.dtype).at[:H, :H].set(weight)
    if Np == H:
        b_p = bias.reshape(1, Np)
    else:
        b_p = jnp.zeros((1, Np), bias.dtype).at[0, :H].set(bias)

    grid = (Mp // tm, Np // tn, Kp // tk)   # reduction axis K last

    out_p = pl.pallas_call(
        mlp_kernel,
        out_shape=jax.ShapeDtypeStruct((Mp, Np), features.dtype),
        grid_spec=pltpu.PrefetchScalarGridSpec(
            num_scalar_prefetch=0,
            grid=grid,
            in_specs=[
                pl.BlockSpec((tm, tk), lambda i, j, k: (i, k)),   # x
                pl.BlockSpec((tn, tk), lambda i, j, k: (j, k)),   # W (untransposed)
                pl.BlockSpec((1, tn), lambda i, j, k: (0, j)),    # bias (resident)
            ],
            out_specs=pl.BlockSpec((tm, tn), lambda i, j, k: (i, j)),
            scratch_shapes=[pltpu.VMEM((tm, tn), jnp.float32)],
        ),
        compiler_params=pltpu.CompilerParams(
            dimension_semantics=("parallel", "parallel", "arbitrary"),
        ),
    )(x_p, w_p, b_p)

    # TODO(synk): for accuracy-tolerant deployments, cast x/W to bfloat16 at
    # this boundary (keep the f32 accumulator) for ~2x MXU/HBM throughput.
    if (Mp, Np) == (B, H):
        return out_p
    return out_p[:B, :H]


def init_params(key, hidden_size):
    # Deterministic init mimicking nn.Linear's uniform(-1/sqrt(fan_in), 1/sqrt(fan_in)).
    kw, kb = jax.random.split(key)
    bound = 1.0 / (hidden_size ** 0.5)
    weight = jax.random.uniform(
        kw, (hidden_size, hidden_size), jnp.float32, -bound, bound)
    bias = jax.random.uniform(
        kb, (hidden_size,), jnp.float32, -bound, bound)
    return weight, bias


if __name__ == "__main__":
    key = jax.random.PRNGKey(0)
    k_x, k_p = jax.random.split(key)

    batch, hidden = 8, 32
    features = jax.random.normal(k_x, (batch, hidden), jnp.float32)
    weight, bias = init_params(k_p, hidden)

    out = mlp_layer(features, weight, bias)
    jax.block_until_ready(out)

    # Cross-check against plain JAX reference (same math as PyTorch Linear+Tanh).
    ref = jnp.tanh(features @ weight.T + bias)
    assert out.shape == ref.shape
    assert jnp.allclose(out, ref, atol=1e-5, rtol=1e-5)

    print("KERNEL_OK")
</pallas_src>

<mosaic_0001>
module attributes {stable_mosaic.version = 11 : i64} {
  func.func @mlp_kernel(%arg0: i32, %arg1: i32, %arg2: i32, %arg3: memref<8x128xf32, #tpu.memory_space<vmem>>, %arg4: memref<128x128xf32, #tpu.memory_space<vmem>>, %arg5: memref<1x128xf32, #tpu.memory_space<vmem>>, %arg6: memref<8x128xf32, #tpu.memory_space<vmem>>, %arg7: memref<8x128xf32, #tpu.memory_space<vmem>>) attributes {dimension_semantics = [#tpu.dimension_semantics<parallel>, #tpu.dimension_semantics<parallel>, #tpu.dimension_semantics<arbitrary>], iteration_bounds = array<i64: 1, 1, 1>, scalar_prefetch = 0 : i64, scratch_operands = 1 : i64, tpu.core_type = #tpu.core_type<tc>, window_params = [{transform_indices = @transform_0, window_bounds = array<i64: 8, 128>}, {transform_indices = @transform_1, window_bounds = array<i64: 128, 128>}, {transform_indices = @transform_2, window_bounds = array<i64: 1, 128>}, {transform_indices = @transform_3, window_bounds = array<i64: 8, 128>}]} {
    %c0_i32 = arith.constant 0 : i32
    %0 = arith.cmpi eq, %arg2, %c0_i32 : i32
    %1 = arith.extui %0 : i1 to i32
    %c0_i32_0 = arith.constant 0 : i32
    %2 = arith.cmpi ne, %1, %c0_i32_0 : i32
    scf.if %2 {
      %cst_10 = arith.constant 0.000000e+00 : f32
      %12 = vector.broadcast %cst_10 : f32 to vector<8x128xf32>
      %c0_11 = arith.constant 0 : index
      %c0_12 = arith.constant 0 : index
      %13 = vector.load %arg7[%c0_11, %c0_12] : memref<8x128xf32, #tpu.memory_space<vmem>>, vector<8x128xf32>
      tpu.vector_store %arg7[%c0_11, %c0_12], %12 {strides = array<i32>} : memref<8x128xf32, #tpu.memory_space<vmem>>, vector<8x128xf32>,
    } else {
    }
    %c0 = arith.constant 0 : index
    %c0_1 = arith.constant 0 : index
    %3 = vector.load %arg7[%c0, %c0_1] : memref<8x128xf32, #tpu.memory_space<vmem>>, vector<8x128xf32>
    %c0_2 = arith.constant 0 : index
    %c0_3 = arith.constant 0 : index
    %4 = vector.load %arg3[%c0_2, %c0_3] : memref<8x128xf32, #tpu.memory_space<vmem>>, vector<8x128xf32>
    %c0_4 = arith.constant 0 : index
    %c0_5 = arith.constant 0 : index
    %5 = vector.load %arg4[%c0_4, %c0_5] : memref<128x128xf32, #tpu.memory_space<vmem>>, vector<128x128xf32>
    %cst = arith.constant dense<0.000000e+00> : vector<8x128xf32>
    %6 = tpu.matmul %4, %5, %cst {dimension_numbers = #tpu.dot_dimension_numbers<[1], [1], [0], [0], [0, 0, 1, 0], [], []>} : vector<8x128xf32>, vector<128x128xf32>, vector<8x128xf32> -> vector<8x128xf32>
    %7 = arith.addf %3, %6 : vector<8x128xf32>
    %c0_6 = arith.constant 0 : index
    %c0_7 = arith.constant 0 : index
    %8 = vector.load %arg7[%c0_6, %c0_7] : memref<8x128xf32, #tpu.memory_space<vmem>>, vector<8x128xf32>
    tpu.vector_store %arg7[%c0_6, %c0_7], %7 {strides = array<i32>} : memref<8x128xf32, #tpu.memory_space<vmem>>, vector<8x128xf32>,
    %c0_i32_8 = arith.constant 0 : i32
    %9 = arith.cmpi eq, %arg2, %c0_i32_8 : i32
    %10 = arith.extui %9 : i1 to i32
    %c0_i32_9 = arith.constant 0 : i32
    %11 = arith.cmpi ne, %10, %c0_i32_9 : i32
    scf.if %11 {
      %c0_10 = arith.constant 0 : index
      %c0_11 = arith.constant 0 : index
      %12 = vector.load %arg7[%c0_10, %c0_11] : memref<8x128xf32, #tpu.memory_space<vmem>>, vector<8x128xf32>
      %c0_12 = arith.constant 0 : index
      %c0_13 = arith.constant 0 : index
      %13 = vector.load %arg5[%c0_12, %c0_13] : memref<1x128xf32, #tpu.memory_space<vmem>>, vector<1x128xf32>
      %14 = vector.broadcast %13 : vector<1x128xf32> to vector<8x128xf32>
      %15 = arith.addf %12, %14 : vector<8x128xf32>
      %16 = math.tanh %15 : vector<8x128xf32>
      %c0_14 = arith.constant 0 : index
      %c0_15 = arith.constant 0 : index
      %17 = vector.load %arg6[%c0_14, %c0_15] : memref<8x128xf32, #tpu.memory_space<vmem>>, vector<8x128xf32>
      tpu.vector_store %arg6[%c0_14, %c0_15], %16 {strides = array<i32>} : memref<8x128xf32, #tpu.memory_space<vmem>>, vector<8x128xf32>,
    } else {
    }
    return
  }
  func.func @transform_0(%arg0: i32, %arg1: i32, %arg2: i32) -> (i32, i32) {
    %c0_i32 = arith.constant 0 : i32
    return %arg0, %arg2 : i32, i32
  }
  func.func @transform_1(%arg0: i32, %arg1: i32, %arg2: i32) -> (i32, i32) {
    %c0_i32 = arith.constant 0 : i32
    return %arg1, %arg2 : i32, i32
  }
  func.func @transform_2(%arg0: i32, %arg1: i32, %arg2: i32) -> (i32, i32) {
    %c0_i32 = arith.constant 0 : i32
    %c0_i32_0 = arith.constant 0 : i32
    return %c0_i32, %arg1 : i32, i32
  }
  func.func @transform_3(%arg0: i32, %arg1: i32, %arg2: i32) -> (i32, i32) {
    %c0_i32 = arith.constant 0 : i32
    return %arg0, %arg1 : i32, i32
  }
}

</mosaic_0001>

<llo_original>
// kernel: mlp_layer.1
$region0: #{mlp_layer.1}
  #allocation0 [shape = 'u32[]', space=smem, size = 0x4, offset = 0x4, fixed_abs, tag = 'smem constant byte address 0x4 - core index']
  #allocation1 [shape = 'u32[144,128]{1,0:T(1,128)}', space=vmem, size = 0x12000, scoped, tag = 'internal scratch']
  #allocation2 [shape = 'f32[8,128]{1,0:T(8,128)}', space=vmem, size = 0x1000, scoped, tag = 'scratch operand']
  %s0 = inlined_call_operand.vmem [shape: f32[8,128], index: 0, kind: input, shape index: {}]
  %s1 = inlined_call_operand.vmem [shape: f32[128,128], index: 1, kind: input, shape index: {}]
  %s2 = inlined_call_operand.vmem [shape: f32[1,128], index: 2, kind: input, shape index: {}]
  %s3 = inlined_call_operand.hbm [shape: f32[8,128], index: 3, kind: output, shape index: {}]
  %s4 = sld [smem:[#allocation0]]
  $region30: #{mlp_layer.1} parent=0
    _
  %s6 = ssub.s32 1, %s4
  %s7 = scalar_select 0, %s6, %s4
  $region1: #{mlp_layer.1} parent=0
    #allocation3 [shape = 'u8[4096]{0}', space=vmem, size = 0x1000, scoped, tag = 'output window, operand 0, single buffered']
    #allocation4 [shape = 's32[1]{0}', space=sflag, size = 0x4, scoped, tag = 'scoped memory for mlp_layer.1']
    %8 = vsyncpa [#allocation4], 0
    // Predicated region
    $region2: #{mlp_layer.1} parent=1 // pred_check
      _
    $region3: #{mlp_layer.1} parent=1 // pred_check_branch
      %10 = sbr.rel (0) target = $region5
    $region4: #{mlp_layer.1} parent=1 // pred_region
      _
    $region5: #{mlp_layer.1} parent=1 // pred_fallthru
      _
    // Predicated region
    $region6: #{mlp_layer.1} parent=1 // pred_check
      _
    $region7: #{mlp_layer.1} parent=1 // pred_check_branch
      %12 = sbr.rel (0) target = $region9
    $region8: #{mlp_layer.1} parent=1 // pred_region
      _
    $region9: #{mlp_layer.1} parent=1 // pred_fallthru
      _
    // Predicated region
    $region10: #{mlp_layer.1} parent=1 // pred_check
      _
    $region11: #{mlp_layer.1} parent=1 // pred_check_branch
      %14 = sbr.rel (0) target = $region13
    $region12: #{mlp_layer.1} parent=1 // pred_region
      _
    $region13: #{mlp_layer.1} parent=1 // pred_fallthru
      _
    %p15 = scmp.eq.s32.totalorder 0, 0
    // Predicated region
    $region14: #{mlp_layer.1} parent=1 // pred_check
      %p16 = pneg %p15
    $region15: #{mlp_layer.1} parent=1 // pred_check_branch
      %18 = sbr.rel (%p16) target = $region17
    $region16: #{mlp_layer.1} parent=1 // pred_region
      %19 = vst [vmem:[#allocation2] sm:$0xff] 0.0
    $region17: #{mlp_layer.1} parent=1 // pred_fallthru
      _
    %v20 = vld [vmem:[#allocation2] sm:$0xff]
    %v21 = vld [vmem:[%s0] sm:$0xff]
    %v22 = vld [vmem:[%s1] sm:$0xff]
    %v23 = vld [vmem:[%s1 + $0x8] sm:$0xff]
    %v24 = vld [vmem:[%s1 + $0x10] sm:$0xff]
    %v25 = vld [vmem:[%s1 + $0x18] sm:$0xff]
    %v26 = vld [vmem:[%s1 + $0x20] sm:$0xff]
    %v27 = vld [vmem:[%s1 + $0x28] sm:$0xff]
    %v28 = vld [vmem:[%s1 + $0x30] sm:$0xff]
    %v29 = vld [vmem:[%s1 + $0x38] sm:$0xff]
    %v30 = vld [vmem:[%s1 + $0x40] sm:$0xff]
    %v31 = vld [vmem:[%s1 + $0x48] sm:$0xff]
    %v32 = vld [vmem:[%s1 + $0x50] sm:$0xff]
    %v33 = vld [vmem:[%s1 + $0x58] sm:$0xff]
    %v34 = vld [vmem:[%s1 + $0x60] sm:$0xff]
    %v35 = vld [vmem:[%s1 + $0x68] sm:$0xff]
    %v36 = vld [vmem:[%s1 + $0x70] sm:$0xff]
    %v37 = vld [vmem:[%s1 + $0x78] sm:$0xff]
    %38 = vmatprep.subr.mxu0 0.0
    %39 = vmatpush1.xpose.msra.mxu0 %v22
    %40 = vmatprep.subr.mxu0 0.0
    %41 = vmatpush1.xpose.msra.mxu0 %v23
    %42 = vmatprep.subr.mxu0 0.0
    %43 = vmatpush1.xpose.msra.mxu0 %v24
    %44 = vmatprep.subr.mxu0 0.0
    %45 = vmatpush1.xpose.msra.mxu0 %v25
    %46 = vmatprep.subr.mxu0 0.0
    %47 = vmatpush1.xpose.msra.mxu0 %v26
    %48 = vmatprep.subr.mxu0 0.0
    %49 = vmatpush1.xpose.msra.mxu0 %v27
    %50 = vmatprep.subr.mxu0 0.0
    %51 = vmatpush1.xpose.msra.mxu0 %v28
    %52 = vmatprep.subr.mxu0 0.0
    %53 = vmatpush1.xpose.msra.mxu0 %v29
    %54 = vmatprep.subr.mxu0 0.0
    %55 = vmatpush1.xpose.msra.mxu0 %v30
    %56 = vmatprep.subr.mxu0 0.0
    %57 = vmatpush1.xpose.msra.mxu0 %v31
    %58 = vmatprep.subr.mxu0 0.0
    %59 = vmatpush1.xpose.msra.mxu0 %v32
    %60 = vmatprep.subr.mxu0 0.0
    %61 = vmatpush1.xpose.msra.mxu0 %v33
    %62 = vmatprep.subr.mxu0 0.0
    %63 = vmatpush1.xpose.msra.mxu0 %v34
    %64 = vmatprep.subr.mxu0 0.0
    %65 = vmatpush1.xpose.msra.mxu0 %v35
    %66 = vmatprep.subr.mxu0 0.0
    %67 = vmatpush1.xpose.msra.mxu0 %v36
    %68 = vmatprep.subr.mxu0 0.0
    %69 = vmatpush1.xpose.msra.mxu0 %v37
    %70 = vmatprep.subr.mxu0 0.0
    %71 = vmatpush1.xpose.msra.mxu0 0.0
    %72 = vmatprep.subr.mxu0 0.0
    %73 = vmatpush1.xpose.msra.mxu0 0.0
    %74 = vmatprep.subr.mxu0 0.0
    %75 = vmatpush1.xpose.msra.mxu0 0.0
    %76 = vmatprep.subr.mxu0 0.0
    %77 = vmatpush1.xpose.msra.mxu0 0.0
    %78 = vmatprep.subr.mxu0 0.0
    %79 = vmatpush1.xpose.msra.mxu0 0.0
    %80 = vmatprep.subr.mxu0 0.0
    %81 = vmatpush1.xpose.msra.mxu0 0.0
    %82 = vmatprep.subr.mxu0 0.0
    %83 = vmatpush1.xpose.msra.mxu0 0.0
    %84 = vmatprep.subr.mxu0 0.0
    %85 = vmatpush1.xpose.msra.mxu0 0.0
    %86 = vmatprep.subr.mxu0 0.0
    %87 = vmatpush1.xpose.msra.mxu0 0.0
    %88 = vmatprep.subr.mxu0 0.0
    %89 = vmatpush1.xpose.msra.mxu0 0.0
    %90 = vmatprep.subr.mxu0 0.0
    %91 = vmatpush1.xpose.msra.mxu0 0.0
    %92 = vmatprep.subr.mxu0 0.0
    %93 = vmatpush1.xpose.msra.mxu0 0.0
    %94 = vmatprep.subr.mxu0 0.0
    %95 = vmatpush1.xpose.msra.mxu0 0.0
    %96 = vmatprep.subr.mxu0 0.0
    %97 = vmatpush1.xpose.msra.mxu0 0.0
    %98 = vmatprep.subr.mxu0 0.0
    %99 = vmatpush1.xpose.msra.mxu0 0.0
    %100 = vmatprep.subr.mxu0 0.0
    %101 = vmatpush1.xpose.msra.mxu0 0.0
    %102 = vmatprep.mubr.f32.mxu0 0.0
    %103 = vmatmul.mubr.f32.gmra.mrb[0].mxu0 %v21
    %v104 = vpop.f32.mrb[0].mxu0
    %v105 = vadd.f32 0.0, %v104
    %v106 = vpop.f32.mrb[0].mxu0
    %107 = vdwg.mxu0
    %v108 = vadd.f32 %v20, %v105
    %109 = vst [vmem:[#allocation2] sm:$0xff] %v108
    // Predicated region
    $region18: #{mlp_layer.1} parent=1 // pred_check
      %p110 = pneg %p15
    $region19: #{mlp_layer.1} parent=1 // pred_check_branch
      %112 = sbr.rel (%p110) target = $region21
    $region20: #{mlp_layer.1} parent=1 // pred_region
      %v113 = vld [vmem:[#allocation2] sm:$0xff]
      %v114 = vld [vmem:[%s2] sm:$0x1]
      %v116 = vlaneseq
      %v117 = vshrl.u32 %v116, 7
      %v118 = vsub.s32 0, %v117
      %v119 = vrot.slane %v114, %v118
      %v121 = vadd.f32 %v113, %v119
      %v122 = vtanh.pop %v121
      %123 = vst [vmem:[#allocation3] sm:$0xff] %v122
    $region21: #{mlp_layer.1} parent=1 // pred_fallthru
      _
    // Predicated region
    $region22: #{mlp_layer.1} parent=1 // pred_check
      _
    $region23: #{mlp_layer.1} parent=1 // pred_check_branch
      %125 = sbr.rel (0) target = $region25
    $region24: #{mlp_layer.1} parent=1 // pred_region
      %s127 = ssub.s32 128, 128
      %128 = vsyncadd [#allocation4], %s127
      %s130 = sshll.u32 [#allocation3], 4
      %s131 = int_to_ptr.vmem [resolvable:$true] %s130
      %133 = dma.vmem_to_hbm [thread:$0]  %s131, 128, %s3, [#allocation4]
    $region25: #{mlp_layer.1} parent=1 // pred_fallthru
      _
    // Predicated region
    $region26: #{mlp_layer.1} parent=1 // pred_check
      _
    $region27: #{mlp_layer.1} parent=1 // pred_check_branch
      %135 = sbr.rel (0) target = $region29
    $region28: #{mlp_layer.1} parent=1 // pred_region
      %136 = dma.done [#allocation4], 128
    $region29: #{mlp_layer.1} parent=1 // pred_fallthru
      _
    %137 = vsyncpa [#allocation4], 1

</llo_original>
